<compile_context>
chip_gen: v6e
topology: v6e:2x2x1
jax: 0.10.0
libtpu: 0.0.40
codegen_flags: <defaults>
</compile_context>

<pallas_src>
import functools

import jax
import jax.numpy as jnp
from jax.experimental import pallas as pl
from jax.experimental.pallas import tpu as pltpu

LN_EPS = 1e-5
LANE = 128
SUBLANE = 8


def _round_up(x, m):
    return (x + m - 1) // m * m


def _pick_tile_m(rows):
    """Row tile: multiple of 16 (bf16 sublane packing). Minimize padded rows,
    prefer >=2 grid steps (v7x megacore), then larger tiles (MXU efficiency)."""
    rows16 = _round_up(rows, 16)
    if rows16 <= 64:
        return rows16
    best_key, best_c = None, 64
    for c in (512, 384, 256, 128, 64):
        rp = _round_up(rows, c)
        key = (rp - rows, 0 if rp // c >= 2 else 1, -c)
        if best_key is None or key < best_key:
            best_key, best_c = key, c
    return best_c


def _layernorm_1pass(h, gamma, beta, d_real):
    """One-pass LayerNorm over the last axis.

    Padded feature lanes of `h` are exactly zero, so sums over the padded axis
    equal sums over the real features; divide by the real feature count.
    Padded gamma/beta lanes are zero so padded lanes stay exactly zero.
    """
    inv_d = 1.0 / float(d_real)
    mu = jnp.sum(h, axis=-1, keepdims=True) * inv_d
    var = jnp.sum(h * h, axis=-1, keepdims=True) * inv_d - mu * mu
    var = jnp.maximum(var, 0.0)          # guard one-pass cancellation
    return (h - mu) * jax.lax.rsqrt(var + LN_EPS) * gamma + beta


def reward_decoder_kernel(x_ref, w1_ref, g1_ref, b1_ref,
                          w2_ref, g2_ref, b2_ref,
                          w3_ref, b3_ref, out_ref, *, d_real):
    # backbone block 1: Linear(no bias) -> LayerNorm -> ReLU
    x = x_ref[...].astype(jnp.bfloat16)          # no-op if x already bf16
    h = jnp.dot(x, w1_ref[...], preferred_element_type=jnp.float32)
    h = _layernorm_1pass(h, g1_ref[...], b1_ref[...], d_real)
    h = jnp.maximum(h, 0.0)

    # backbone block 2: Linear(no bias) -> LayerNorm -> ReLU
    h = jnp.dot(h.astype(jnp.bfloat16), w2_ref[...],
                preferred_element_type=jnp.float32)
    h = _layernorm_1pass(h, g2_ref[...], b2_ref[...], d_real)
    h = jnp.maximum(h, 0.0)

    # head: Linear with bias -> num_classes (store only the real class columns)
    r = jnp.dot(h.astype(jnp.bfloat16), w3_ref[...],
                preferred_element_type=jnp.float32)
    r = r + b3_ref[...]
    c_out = out_ref.shape[-1]
    out_ref[...] = r[:, :c_out].astype(out_ref.dtype)


def _const_spec(shape):
    """Grid-invariant block: constant index_map + single buffer (DMA'd once)."""
    zeros = (0,) * len(shape)
    return pl.BlockSpec(shape, lambda *_: zeros, pipeline_mode=pl.Buffered(1))


def reward_decoder(feat, params, *, tile_m=None):
    """feat: (B, L, D) float32. Returns (B, L, num_classes) float32."""
    w1, g1, b1, w2, g2, b2, w3, b3 = params
    B, L, D = feat.shape
    C = w3.shape[1]

    Dp = _round_up(D, LANE)              # lane-pad features for MXU / LN reductions
    Cp = _round_up(C, LANE)              # lane-pad head width for the MXU
    rows = B * L

    tm = tile_m if tile_m is not None else _pick_tile_m(rows)
    tm = max(16, _round_up(min(tm, _round_up(rows, 16)), 16))
    rows_p = _round_up(rows, tm)

    x2d = feat.reshape(rows, D)
    need_pad = (Dp != D) or (rows_p != rows)
    if need_pad:
        # pad once and cast to bf16 (fewer total HBM bytes than padding in f32)
        x2d = jnp.pad(x2d, ((0, rows_p - rows), (0, Dp - D))).astype(jnp.bfloat16)
    # else: pass f32 straight through; the kernel casts to bf16 (saves a round trip)

    def pad2(a, r, c):
        return jnp.pad(a, ((0, r - a.shape[0]), (0, c - a.shape[1])))

    w1p = pad2(w1, Dp, Dp).astype(jnp.bfloat16)
    w2p = pad2(w2, Dp, Dp).astype(jnp.bfloat16)
    w3p = pad2(w3, Dp, Cp).astype(jnp.bfloat16)
    # LN affine params stay f32; padded lanes get gamma=0 / beta=0 so they remain 0.
    g1p = pad2(g1, 1, Dp).astype(jnp.float32)
    b1p = pad2(b1, 1, Dp).astype(jnp.float32)
    g2p = pad2(g2, 1, Dp).astype(jnp.float32)
    b2p = pad2(b2, 1, Dp).astype(jnp.float32)
    b3p = pad2(b3, 1, Cp).astype(jnp.float32)

    grid = (rows_p // tm,)

    # --- VMEM budget: single-buffered weights + double-buffered x/out tiles ---
    x_bytes = x2d.dtype.itemsize
    weight_bytes = (2 * Dp * Dp + Dp * Cp) * 2 + (4 * Dp + Cp) * 4
    io_bytes = 2 * tm * Dp * x_bytes + 2 * tm * C * 4
    scratch_bytes = 4 * tm * Dp * 4              # f32 intermediates headroom
    vmem_needed = weight_bytes + io_bytes + scratch_bytes
    vmem_limit = int(min(max(int(vmem_needed * 1.25) + (2 << 20), 16 << 20),
                         100 << 20))

    cost = pl.CostEstimate(
        flops=2 * rows_p * Dp * (2 * Dp + Cp),
        transcendentals=2 * rows_p,
        bytes_accessed=rows_p * Dp * x_bytes + weight_bytes + rows_p * C * 4,
    )

    kernel = functools.partial(reward_decoder_kernel, d_real=D)

    out = pl.pallas_call(
        kernel,
        out_shape=jax.ShapeDtypeStruct((rows_p, C), jnp.float32),
        grid_spec=pltpu.PrefetchScalarGridSpec(
            num_scalar_prefetch=0,
            grid=grid,
            in_specs=[
                pl.BlockSpec((tm, Dp), lambda i: (i, 0)),   # x row tiles (dbl-buf)
                _const_spec((Dp, Dp)),   # w1 (resident, single buffer)
                _const_spec((1, Dp)),    # gamma1
                _const_spec((1, Dp)),    # beta1
                _const_spec((Dp, Dp)),   # w2 (resident, single buffer)
                _const_spec((1, Dp)),    # gamma2
                _const_spec((1, Dp)),    # beta2
                _const_spec((Dp, Cp)),   # w3 (resident, single buffer)
                _const_spec((1, Cp)),    # b3
            ],
            out_specs=pl.BlockSpec((tm, C), lambda i: (i, 0)),
        ),
        compiler_params=pltpu.CompilerParams(
            dimension_semantics=("parallel",),
            vmem_limit_bytes=vmem_limit,
        ),
        cost_estimate=cost,
    )(x2d, w1p, g1p, b1p, w2p, g2p, b2p, w3p, b3p)

    return out[:rows].reshape(B, L, C)


def init_params(key, transformer_hidden_dim, num_classes):
    D, C = transformer_hidden_dim, num_classes
    k1, k2, k3, k4 = jax.random.split(key, 4)
    scale = 1.0 / jnp.sqrt(D)
    # Linear weights stored as (in, out) == transpose of PyTorch (out, in)
    w1 = jax.random.uniform(k1, (D, D), jnp.float32, -scale, scale)
    w2 = jax.random.uniform(k2, (D, D), jnp.float32, -scale, scale)
    w3 = jax.random.uniform(k3, (D, C), jnp.float32, -scale, scale)
    b3 = jax.random.uniform(k4, (1, C), jnp.float32, -scale, scale)
    # LayerNorm affine params (PyTorch default init: weight=1, bias=0)
    g1 = jnp.ones((1, D), jnp.float32)
    b1 = jnp.zeros((1, D), jnp.float32)
    g2 = jnp.ones((1, D), jnp.float32)
    b2 = jnp.zeros((1, D), jnp.float32)
    return (w1, g1, b1, w2, g2, b2, w3, b3)


def _layernorm_ref(h, gamma, beta):
    mu = jnp.mean(h, axis=-1, keepdims=True)
    var = jnp.mean((h - mu) ** 2, axis=-1, keepdims=True)
    return (h - mu) * jax.lax.rsqrt(var + LN_EPS) * gamma + beta


def reward_decoder_ref(feat, params):
    """Pure-JAX f32 reference (matches the PyTorch module)."""
    w1, g1, b1, w2, g2, b2, w3, b3 = params
    h = feat @ w1
    h = jnp.maximum(_layernorm_ref(h, g1, b1), 0.0)
    h = h @ w2
    h = jnp.maximum(_layernorm_ref(h, g2, b2), 0.0)
    return h @ w3 + b3


if __name__ == "__main__":
    key = jax.random.PRNGKey(0)
    B, L = 2, 8                      # batch, sequence
    transformer_hidden_dim = 32
    num_classes = 4

    k_feat, k_param = jax.random.split(key)
    feat = jax.random.normal(k_feat, (B, L, transformer_hidden_dim), jnp.float32)
    params = init_params(k_param, transformer_hidden_dim, num_classes)

    reward = reward_decoder(feat, params)
    reward = jax.block_until_ready(reward)

    ref = reward_decoder_ref(feat, params)
    assert reward.shape == (B, L, num_classes)
    # bf16 matmul operands with f32 accumulation -> loosened tolerance vs f32 ref.
    assert jnp.allclose(reward, ref, atol=5e-2, rtol=5e-2), (
        float(jnp.max(jnp.abs(reward - ref))))
    print("KERNEL_OK")
</pallas_src>

<mosaic_0001>
module attributes {stable_mosaic.version = 11 : i64} {
  func.func @reward_decoder_kernel(%arg0: i32, %arg1: memref<16x128xbf16, #tpu.memory_space<vmem>>, %arg2: memref<128x128xbf16, #tpu.memory_space<vmem>>, %arg3: memref<1x128xf32, #tpu.memory_space<vmem>>, %arg4: memref<1x128xf32, #tpu.memory_space<vmem>>, %arg5: memref<128x128xbf16, #tpu.memory_space<vmem>>, %arg6: memref<1x128xf32, #tpu.memory_space<vmem>>, %arg7: memref<1x128xf32, #tpu.memory_space<vmem>>, %arg8: memref<128x128xbf16, #tpu.memory_space<vmem>>, %arg9: memref<1x128xf32, #tpu.memory_space<vmem>>, %arg10: memref<16x4xf32, #tpu.memory_space<vmem>>) attributes {dimension_semantics = [#tpu.dimension_semantics<parallel>], iteration_bounds = array<i64: 1>, scalar_prefetch = 0 : i64, scratch_operands = 0 : i64, tpu.core_type = #tpu.core_type<tc>, window_params = [{transform_indices = @transform_0, window_bounds = array<i64: 16, 128>}, {pipeline_mode = #tpu.pipeline_mode<synchronous>, transform_indices = @transform_1, window_bounds = array<i64: 128, 128>}, {pipeline_mode = #tpu.pipeline_mode<synchronous>, transform_indices = @transform_2, window_bounds = array<i64: 1, 128>}, {pipeline_mode = #tpu.pipeline_mode<synchronous>, transform_indices = @transform_3, window_bounds = array<i64: 1, 128>}, {pipeline_mode = #tpu.pipeline_mode<synchronous>, transform_indices = @transform_4, window_bounds = array<i64: 128, 128>}, {pipeline_mode = #tpu.pipeline_mode<synchronous>, transform_indices = @transform_5, window_bounds = array<i64: 1, 128>}, {pipeline_mode = #tpu.pipeline_mode<synchronous>, transform_indices = @transform_6, window_bounds = array<i64: 1, 128>}, {pipeline_mode = #tpu.pipeline_mode<synchronous>, transform_indices = @transform_7, window_bounds = array<i64: 128, 128>}, {pipeline_mode = #tpu.pipeline_mode<synchronous>, transform_indices = @transform_8, window_bounds = array<i64: 1, 128>}, {transform_indices = @transform_9, window_bounds = array<i64: 16, 4>}]} {
    %c0 = arith.constant 0 : index
    %c0_0 = arith.constant 0 : index
    %0 = vector.load %arg1[%c0, %c0_0] : memref<16x128xbf16, #tpu.memory_space<vmem>>, vector<16x128xbf16>
    %c0_1 = arith.constant 0 : index
    %c0_2 = arith.constant 0 : index
    %1 = vector.load %arg2[%c0_1, %c0_2] : memref<128x128xbf16, #tpu.memory_space<vmem>>, vector<128x128xbf16>
    %cst = arith.constant dense<0.000000e+00> : vector<16x128xf32>
    %2 = tpu.matmul %0, %1, %cst {dimension_numbers = #tpu.dot_dimension_numbers<[1], [0], [0], [1], [0, 0, 1, 1], [], []>} : vector<16x128xbf16>, vector<128x128xbf16>, vector<16x128xf32> -> vector<16x128xf32>
    %c0_3 = arith.constant 0 : index
    %c0_4 = arith.constant 0 : index
    %3 = vector.load %arg3[%c0_3, %c0_4] : memref<1x128xf32, #tpu.memory_space<vmem>>, vector<1x128xf32>
    %c0_5 = arith.constant 0 : index
    %c0_6 = arith.constant 0 : index
    %4 = vector.load %arg4[%c0_5, %c0_6] : memref<1x128xf32, #tpu.memory_space<vmem>>, vector<1x128xf32>
    %cst_7 = arith.constant dense<0.000000e+00> : vector<16xf32>
    %5 = vector.multi_reduction <add>, %2, %cst_7 [1] : vector<16x128xf32> to vector<16xf32>
    %6 = vector.shape_cast %5 : vector<16xf32> to vector<16x1xf32>
    %cst_8 = arith.constant 3.125000e-02 : f32
    %7 = vector.broadcast %cst_8 : f32 to vector<16x1xf32>
    %8 = arith.mulf %6, %7 : vector<16x1xf32>
    %9 = arith.mulf %2, %2 : vector<16x128xf32>
    %cst_9 = arith.constant dense<0.000000e+00> : vector<16xf32>
    %10 = vector.multi_reduction <add>, %9, %cst_9 [1] : vector<16x128xf32> to vector<16xf32>
    %11 = vector.shape_cast %10 : vector<16xf32> to vector<16x1xf32>
    %cst_10 = arith.constant 3.125000e-02 : f32
    %12 = vector.broadcast %cst_10 : f32 to vector<16x1xf32>
    %13 = arith.mulf %11, %12 : vector<16x1xf32>
    %14 = arith.mulf %8, %8 : vector<16x1xf32>
    %15 = arith.subf %13, %14 : vector<16x1xf32>
    %cst_11 = arith.constant 0.000000e+00 : f32
    %16 = vector.broadcast %cst_11 : f32 to vector<16x1xf32>
    %17 = arith.maximumf %15, %16 : vector<16x1xf32>
    %18 = vector.broadcast %8 : vector<16x1xf32> to vector<16x128xf32>
    %19 = arith.subf %2, %18 : vector<16x128xf32>
    %cst_12 = arith.constant 9.99999974E-6 : f32
    %20 = vector.broadcast %cst_12 : f32 to vector<16x1xf32>
    %21 = arith.addf %17, %20 : vector<16x1xf32>
    %22 = math.rsqrt %21 : vector<16x1xf32>
    %23 = vector.broadcast %22 : vector<16x1xf32> to vector<16x128xf32>
    %24 = arith.mulf %19, %23 : vector<16x128xf32>
    %25 = vector.broadcast %3 : vector<1x128xf32> to vector<16x128xf32>
    %26 = arith.mulf %24, %25 : vector<16x128xf32>
    %27 = vector.broadcast %4 : vector<1x128xf32> to vector<16x128xf32>
    %28 = arith.addf %26, %27 : vector<16x128xf32>
    %cst_13 = arith.constant 0.000000e+00 : f32
    %29 = vector.broadcast %cst_13 : f32 to vector<16x128xf32>
    %30 = arith.maximumf %28, %29 : vector<16x128xf32>
    %31 = arith.truncf %30 : vector<16x128xf32> to vector<16x128xbf16>
    %c0_14 = arith.constant 0 : index
    %c0_15 = arith.constant 0 : index
    %32 = vector.load %arg5[%c0_14, %c0_15] : memref<128x128xbf16, #tpu.memory_space<vmem>>, vector<128x128xbf16>
    %cst_16 = arith.constant dense<0.000000e+00> : vector<16x128xf32>
    %33 = tpu.matmul %31, %32, %cst_16 {dimension_numbers = #tpu.dot_dimension_numbers<[1], [0], [0], [1], [0, 0, 1, 1], [], []>} : vector<16x128xbf16>, vector<128x128xbf16>, vector<16x128xf32> -> vector<16x128xf32>
    %c0_17 = arith.constant 0 : index
    %c0_18 = arith.constant 0 : index
    %34 = vector.load %arg6[%c0_17, %c0_18] : memref<1x128xf32, #tpu.memory_space<vmem>>, vector<1x128xf32>
    %c0_19 = arith.constant 0 : index
    %c0_20 = arith.constant 0 : index
    %35 = vector.load %arg7[%c0_19, %c0_20] : memref<1x128xf32, #tpu.memory_space<vmem>>, vector<1x128xf32>
    %cst_21 = arith.constant dense<0.000000e+00> : vector<16xf32>
    %36 = vector.multi_reduction <add>, %33, %cst_21 [1] : vector<16x128xf32> to vector<16xf32>
    %37 = vector.shape_cast %36 : vector<16xf32> to vector<16x1xf32>
    %cst_22 = arith.constant 3.125000e-02 : f32
    %38 = vector.broadcast %cst_22 : f32 to vector<16x1xf32>
    %39 = arith.mulf %37, %38 : vector<16x1xf32>
    %40 = arith.mulf %33, %33 : vector<16x128xf32>
    %cst_23 = arith.constant dense<0.000000e+00> : vector<16xf32>
    %41 = vector.multi_reduction <add>, %40, %cst_23 [1] : vector<16x128xf32> to vector<16xf32>
    %42 = vector.shape_cast %41 : vector<16xf32> to vector<16x1xf32>
    %cst_24 = arith.constant 3.125000e-02 : f32
    %43 = vector.broadcast %cst_24 : f32 to vector<16x1xf32>
    %44 = arith.mulf %42, %43 : vector<16x1xf32>
    %45 = arith.mulf %39, %39 : vector<16x1xf32>
    %46 = arith.subf %44, %45 : vector<16x1xf32>
    %cst_25 = arith.constant 0.000000e+00 : f32
    %47 = vector.broadcast %cst_25 : f32 to vector<16x1xf32>
    %48 = arith.maximumf %46, %47 : vector<16x1xf32>
    %49 = vector.broadcast %39 : vector<16x1xf32> to vector<16x128xf32>
    %50 = arith.subf %33, %49 : vector<16x128xf32>
    %cst_26 = arith.constant 9.99999974E-6 : f32
    %51 = vector.broadcast %cst_26 : f32 to vector<16x1xf32>
    %52 = arith.addf %48, %51 : vector<16x1xf32>
    %53 = math.rsqrt %52 : vector<16x1xf32>
    %54 = vector.broadcast %53 : vector<16x1xf32> to vector<16x128xf32>
    %55 = arith.mulf %50, %54 : vector<16x128xf32>
    %56 = vector.broadcast %34 : vector<1x128xf32> to vector<16x128xf32>
    %57 = arith.mulf %55, %56 : vector<16x128xf32>
    %58 = vector.broadcast %35 : vector<1x128xf32> to vector<16x128xf32>
    %59 = arith.addf %57, %58 : vector<16x128xf32>
    %cst_27 = arith.constant 0.000000e+00 : f32
    %60 = vector.broadcast %cst_27 : f32 to vector<16x128xf32>
    %61 = arith.maximumf %59, %60 : vector<16x128xf32>
    %62 = arith.truncf %61 : vector<16x128xf32> to vector<16x128xbf16>
    %c0_28 = arith.constant 0 : index
    %c0_29 = arith.constant 0 : index
    %63 = vector.load %arg8[%c0_28, %c0_29] : memref<128x128xbf16, #tpu.memory_space<vmem>>, vector<128x128xbf16>
    %cst_30 = arith.constant dense<0.000000e+00> : vector<16x128xf32>
    %64 = tpu.matmul %62, %63, %cst_30 {dimension_numbers = #tpu.dot_dimension_numbers<[1], [0], [0], [1], [0, 0, 1, 1], [], []>} : vector<16x128xbf16>, vector<128x128xbf16>, vector<16x128xf32> -> vector<16x128xf32>
    %c0_31 = arith.constant 0 : index
    %c0_32 = arith.constant 0 : index
    %65 = vector.load %arg9[%c0_31, %c0_32] : memref<1x128xf32, #tpu.memory_space<vmem>>, vector<1x128xf32>
    %66 = vector.broadcast %65 : vector<1x128xf32> to vector<16x128xf32>
    %67 = arith.addf %64, %66 : vector<16x128xf32>
    %68 = vector.extract_strided_slice %67 {offsets = [0, 0], sizes = [16, 4], strides = [1, 1]} : vector<16x128xf32> to vector<16x4xf32>
    %c0_33 = arith.constant 0 : index
    %c0_34 = arith.constant 0 : index
    %69 = vector.load %arg10[%c0_33, %c0_34] : memref<16x4xf32, #tpu.memory_space<vmem>>, vector<16x4xf32>
    tpu.vector_store %arg10[%c0_33, %c0_34], %68 {strides = array<i32>} : memref<16x4xf32, #tpu.memory_space<vmem>>, vector<16x4xf32>,
    return
  }
  func.func @transform_0(%arg0: i32) -> (i32, i32) {
    %c0_i32 = arith.constant 0 : i32
    %c0_i32_0 = arith.constant 0 : i32
    return %arg0, %c0_i32 : i32, i32
  }
  func.func @transform_1(%arg0: i32) -> (i32, i32) {
    %c0_i32 = arith.constant 0 : i32
    %c0_i32_0 = arith.constant 0 : i32
    %c0_i32_1 = arith.constant 0 : i32
    return %c0_i32, %c0_i32_0 : i32, i32
  }
  func.func @transform_2(%arg0: i32) -> (i32, i32) {
    %c0_i32 = arith.constant 0 : i32
    %c0_i32_0 = arith.constant 0 : i32
    %c0_i32_1 = arith.constant 0 : i32
    return %c0_i32, %c0_i32_0 : i32, i32
  }
  func.func @transform_3(%arg0: i32) -> (i32, i32) {
    %c0_i32 = arith.constant 0 : i32
    %c0_i32_0 = arith.constant 0 : i32
    %c0_i32_1 = arith.constant 0 : i32
    return %c0_i32, %c0_i32_0 : i32, i32
  }
  func.func @transform_4(%arg0: i32) -> (i32, i32) {
    %c0_i32 = arith.constant 0 : i32
    %c0_i32_0 = arith.constant 0 : i32
    %c0_i32_1 = arith.constant 0 : i32
    return %c0_i32, %c0_i32_0 : i32, i32
  }
  func.func @transform_5(%arg0: i32) -> (i32, i32) {
    %c0_i32 = arith.constant 0 : i32
    %c0_i32_0 = arith.constant 0 : i32
    %c0_i32_1 = arith.constant 0 : i32
    return %c0_i32, %c0_i32_0 : i32, i32
  }
  func.func @transform_6(%arg0: i32) -> (i32, i32) {
    %c0_i32 = arith.constant 0 : i32
    %c0_i32_0 = arith.constant 0 : i32
    %c0_i32_1 = arith.constant 0 : i32
    return %c0_i32, %c0_i32_0 : i32, i32
  }
  func.func @transform_7(%arg0: i32) -> (i32, i32) {
    %c0_i32 = arith.constant 0 : i32
    %c0_i32_0 = arith.constant 0 : i32
    %c0_i32_1 = arith.constant 0 : i32
    return %c0_i32, %c0_i32_0 : i32, i32
  }
  func.func @transform_8(%arg0: i32) -> (i32, i32) {
    %c0_i32 = arith.constant 0 : i32
    %c0_i32_0 = arith.constant 0 : i32
    %c0_i32_1 = arith.constant 0 : i32
    return %c0_i32, %c0_i32_0 : i32, i32
  }
  func.func @transform_9(%arg0: i32) -> (i32, i32) {
    %c0_i32 = arith.constant 0 : i32
    %c0_i32_0 = arith.constant 0 : i32
    return %arg0, %c0_i32 : i32, i32
  }
}

</mosaic_0001>

<llo_original>
// kernel: tpu_custom_call.1
$region0: #{tpu_custom_call.1}
  #allocation0 [shape = 'u32[]', space=smem, size = 0x4, offset = 0x4, fixed_abs, tag = 'smem constant byte address 0x4 - core index']
  #allocation1 [shape = 'u32[144,128]{1,0:T(1,128)}', space=vmem, size = 0x12000, scoped, tag = 'internal scratch']
  %s0 = inlined_call_operand.hbm [shape: bf16[16,128], index: 0, kind: input, shape index: {}]
  %s1 = inlined_call_operand.hbm [shape: bf16[128,128], index: 1, kind: input, shape index: {}]
  %s2 = inlined_call_operand.vmem [shape: f32[1,128], index: 2, kind: input, shape index: {}]
  %s3 = inlined_call_operand.vmem [shape: f32[1,128], index: 3, kind: input, shape index: {}]
  %s4 = inlined_call_operand.hbm [shape: bf16[128,128], index: 4, kind: input, shape index: {}]
  %s5 = inlined_call_operand.vmem [shape: f32[1,128], index: 5, kind: input, shape index: {}]
  %s6 = inlined_call_operand.vmem [shape: f32[1,128], index: 6, kind: input, shape index: {}]
  %s7 = inlined_call_operand.hbm [shape: bf16[128,128], index: 7, kind: input, shape index: {}]
  %s8 = inlined_call_operand.vmem [shape: f32[1,128], index: 8, kind: input, shape index: {}]
  %s9 = inlined_call_operand.vmem [shape: f32[16,4], index: 9, kind: output, shape index: {}]
  %s10 = sld [smem:[#allocation0]]
  $region62: #{tpu_custom_call.1} parent=0
    _
  %s12 = ssub.s32 1, %s10
  %s13 = scalar_select 0, %s12, %s10
  $region1: #{tpu_custom_call.1} parent=0
    #allocation2 [shape = 'u8[4096]{0}', space=vmem, size = 0x1000, scoped, tag = 'input window, operand 0, single buffered']
    #allocation3 [shape = 's32[1]{0}', space=sflag, size = 0x4, scoped, tag = 'scoped memory for tpu_custom_call.1']
    #allocation4 [shape = 'u8[32768]{0}', space=vmem, size = 0x8000, scoped, tag = 'input window, operand 1, single buffered']
    #allocation5 [shape = 's32[1]{0}', space=sflag, size = 0x4, scoped, tag = 'scoped memory for tpu_custom_call.1']
    #allocation6 [shape = 'u8[32768]{0}', space=vmem, size = 0x8000, scoped, tag = 'input window, operand 4, single buffered']
    #allocation7 [shape = 'u8[32768]{0}', space=vmem, size = 0x8000, scoped, tag = 'input window, operand 7, single buffered']
    #allocation8 [shape = 's32[1]{0}', space=sflag, size = 0x4, scoped, tag = 'scoped memory for tpu_custom_call.1']
    %14 = vsyncpa [#allocation3], 0
    %15 = vsyncpa [#allocation5], 0
    %16 = vsyncpa [#allocation8], 0
    // Predicated region
    $region2: #{tpu_custom_call.1} parent=1 // pred_check
      _
    $region3: #{tpu_custom_call.1} parent=1 // pred_check_branch
      %18 = sbr.rel (0) target = $region5
    $region4: #{tpu_custom_call.1} parent=1 // pred_region
      %s20 = ssub.s32 128, 128
      %21 = vsyncadd [#allocation3], %s20
      %s22 = sshll.u32 [#allocation2], 4
      %s23 = int_to_ptr.vmem [resolvable:$true] %s22
      %28 = dma.hbm_to_vmem [thread:$0]  %s0, 128, %s23, [#allocation3], 64, 64, 4
    $region5: #{tpu_custom_call.1} parent=1 // pred_fallthru
      _
    // Predicated region
    $region6: #{tpu_custom_call.1} parent=1 // pred_check
      _
    $region7: #{tpu_custom_call.1} parent=1 // pred_check_branch
      %30 = sbr.rel (0) target = $region9
    $region8: #{tpu_custom_call.1} parent=1 // pred_region
      %s32 = ssub.s32 1024, 1024
      %33 = vsyncadd [#allocation5], %s32
      %s34 = sshll.u32 [#allocation4], 4
      %s35 = int_to_ptr.vmem [resolvable:$true] %s34
      %40 = dma.hbm_to_vmem [thread:$0]  %s1, 1024, %s35, [#allocation5], 64, 64, 4
    $region9: #{tpu_custom_call.1} parent=1 // pred_fallthru
      _
    // Predicated region
    $region10: #{tpu_custom_call.1} parent=1 // pred_check
      _
    $region11: #{tpu_custom_call.1} parent=1 // pred_check_branch
      %42 = sbr.rel (0) target = $region13
    $region12: #{tpu_custom_call.1} parent=1 // pred_region
      _
    $region13: #{tpu_custom_call.1} parent=1 // pred_fallthru
      _
    // Predicated region
    $region14: #{tpu_custom_call.1} parent=1 // pred_check
      _
    $region15: #{tpu_custom_call.1} parent=1 // pred_check_branch
      %44 = sbr.rel (0) target = $region17
    $region16: #{tpu_custom_call.1} parent=1 // pred_region
      _
    $region17: #{tpu_custom_call.1} parent=1 // pred_fallthru
      _
    // Predicated region
    $region18: #{tpu_custom_call.1} parent=1 // pred_check
      _
    $region19: #{tpu_custom_call.1} parent=1 // pred_check_branch
      %46 = sbr.rel (0) target = $region21
    $region20: #{tpu_custom_call.1} parent=1 // pred_region
      %s48 = ssub.s32 1024, 1024
      %49 = vsyncadd [#allocation5], %s48
      %s50 = sshll.u32 [#allocation6], 4
      %s51 = int_to_ptr.vmem [resolvable:$true] %s50
      %56 = dma.hbm_to_vmem [thread:$0]  %s4, 1024, %s51, [#allocation5], 64, 64, 4
    $region21: #{tpu_custom_call.1} parent=1 // pred_fallthru
      _
    // Predicated region
    $region22: #{tpu_custom_call.1} parent=1 // pred_check
      _
    $region23: #{tpu_custom_call.1} parent=1 // pred_check_branch
      %58 = sbr.rel (0) target = $region25
    $region24: #{tpu_custom_call.1} parent=1 // pred_region
      _
    $region25: #{tpu_custom_call.1} parent=1 // pred_fallthru
      _
    // Predicated region
    $region26: #{tpu_custom_call.1} parent=1 // pred_check
      _
    $region27: #{tpu_custom_call.1} parent=1 // pred_check_branch
      %60 = sbr.rel (0) target = $region29
    $region28: #{tpu_custom_call.1} parent=1 // pred_region
      _
    $region29: #{tpu_custom_call.1} parent=1 // pred_fallthru
      _
    // Predicated region
    $region30: #{tpu_custom_call.1} parent=1 // pred_check
      _
    $region31: #{tpu_custom_call.1} parent=1 // pred_check_branch
      %62 = sbr.rel (0) target = $region33
    $region32: #{tpu_custom_call.1} parent=1 // pred_region
      %s64 = ssub.s32 1024, 1024
      %65 = vsyncadd [#allocation8], %s64
      %s66 = sshll.u32 [#allocation7], 4
      %s67 = int_to_ptr.vmem [resolvable:$true] %s66
      %72 = dma.hbm_to_vmem [thread:$0]  %s7, 1024, %s67, [#allocation8], 64, 64, 4
    $region33: #{tpu_custom_call.1} parent=1 // pred_fallthru
      _
    // Predicated region
    $region34: #{tpu_custom_call.1} parent=1 // pred_check
      _
    $region35: #{tpu_custom_call.1} parent=1 // pred_check_branch
      %74 = sbr.rel (0) target = $region37
    $region36: #{tpu_custom_call.1} parent=1 // pred_region
      _
    $region37: #{tpu_custom_call.1} parent=1 // pred_fallthru
      _
    // Predicated region
    $region38: #{tpu_custom_call.1} parent=1 // pred_check
      _
    $region39: #{tpu_custom_call.1} parent=1 // pred_check_branch
      %76 = sbr.rel (0) target = $region41
    $region40: #{tpu_custom_call.1} parent=1 // pred_region
      %77 = dma.done [#allocation3], 128
    $region41: #{tpu_custom_call.1} parent=1 // pred_fallthru
      _
    // Predicated region
    $region42: #{tpu_custom_call.1} parent=1 // pred_check
      _
    $region43: #{tpu_custom_call.1} parent=1 // pred_check_branch
      %79 = sbr.rel (0) target = $region45
    $region44: #{tpu_custom_call.1} parent=1 // pred_region
      %80 = dma.done [#allocation5], 1024
    $region45: #{tpu_custom_call.1} parent=1 // pred_fallthru
      _
    // Predicated region
    $region46: #{tpu_custom_call.1} parent=1 // pred_check
      _
    $region47: #{tpu_custom_call.1} parent=1 // pred_check_branch
      %82 = sbr.rel (0) target = $region49
    $region48: #{tpu_custom_call.1} parent=1 // pred_region
      %83 = dma.done [#allocation5], 1024
    $region49: #{tpu_custom_call.1} parent=1 // pred_fallthru
      _
    // Predicated region
    $region50: #{tpu_custom_call.1} parent=1 // pred_check
      _
    $region51: #{tpu_custom_call.1} parent=1 // pred_check_branch
      %85 = sbr.rel (0) target = $region53
    $region52: #{tpu_custom_call.1} parent=1 // pred_region
      %86 = dma.done [#allocation8], 1024
    $region53: #{tpu_custom_call.1} parent=1 // pred_fallthru
      _
    %v88 = vld [vmem:[#allocation2] sm:$0xf]
    %v89 = vld [vmem:[#allocation2 + $0x4] sm:$0xf]
    %v90 = vld [vmem:[#allocation4] sm:$0xf]
    %v91 = vld [vmem:[#allocation4 + $0x4] sm:$0xf]
    %v92 = vld [vmem:[#allocation4 + $0x8] sm:$0xf]
    %v93 = vld [vmem:[#allocation4 + $0xc] sm:$0xf]
    %v94 = vld [vmem:[#allocation4 + $0x10] sm:$0xf]
    %v95 = vld [vmem:[#allocation4 + $0x14] sm:$0xf]
    %v96 = vld [vmem:[#allocation4 + $0x18] sm:$0xf]
    %v97 = vld [vmem:[#allocation4 + $0x1c] sm:$0xf]
    %v98 = vld [vmem:[#allocation4 + $0x20] sm:$0xf]
    %v99 = vld [vmem:[#allocation4 + $0x24] sm:$0xf]
    %v100 = vld [vmem:[#allocation4 + $0x28] sm:$0xf]
    %v101 = vld [vmem:[#allocation4 + $0x2c] sm:$0xf]
    %v102 = vld [vmem:[#allocation4 + $0x30] sm:$0xf]
    %v103 = vld [vmem:[#allocation4 + $0x34] sm:$0xf]
    %v104 = vld [vmem:[#allocation4 + $0x38] sm:$0xf]
    %v105 = vld [vmem:[#allocation4 + $0x3c] sm:$0xf]
    %v108 = vunpack.c.l.b16 %v88
    %v109 = vunpack.c.l.b16 %v89
    %v110 = vpack.c.b16 %v109, %v108
    %v128 = vunpack.c.l.b16 %v90
    %v129 = vunpack.c.l.b16 %v91
    %v130 = vunpack.c.l.b16 %v92
    %v131 = vunpack.c.l.b16 %v93
    %v132 = vunpack.c.l.b16 %v94
    %v133 = vunpack.c.l.b16 %v95
    %v134 = vunpack.c.l.b16 %v96
    %v135 = vunpack.c.l.b16 %v97
    %v136 = vunpack.c.l.b16 %v98
    %v137 = vunpack.c.l.b16 %v99
    %v138 = vunpack.c.l.b16 %v100
    %v139 = vunpack.c.l.b16 %v101
    %v140 = vunpack.c.l.b16 %v102
    %v141 = vunpack.c.l.b16 %v103
    %v142 = vunpack.c.l.b16 %v104
    %v143 = vunpack.c.l.b16 %v105
    %v144 = vpack.c.b16 %v129, %v128
    %v145 = vpack.c.b16 %v131, %v130
    %v146 = vpack.c.b16 %v133, %v132
    %v147 = vpack.c.b16 %v135, %v134
    %v148 = vpack.c.b16 %v137, %v136
    %v149 = vpack.c.b16 %v139, %v138
    %v150 = vpack.c.b16 %v141, %v140
    %v151 = vpack.c.b16 %v143, %v142
    %160 = vmatprep.subr.bf16.mxu0 0
    %161 = vmatpush1.bf16.msra.mxu0 %v151
    %162 = vmatprep.subr.bf16.mxu0 0
    %163 = vmatpush1.bf16.msra.mxu0 %v150
    %164 = vmatprep.subr.bf16.mxu0 0
    %165 = vmatpush1.bf16.msra.mxu0 %v149
    %166 = vmatprep.subr.bf16.mxu0 0
    %167 = vmatpush1.bf16.msra.mxu0 %v148
    %168 = vmatprep.subr.bf16.mxu0 0
    %169 = vmatpush1.bf16.msra.mxu0 %v147
    %170 = vmatprep.subr.bf16.mxu0 0
    %171 = vmatpush1.bf16.msra.mxu0 %v146
    %172 = vmatprep.subr.bf16.mxu0 0
    %173 = vmatpush1.bf16.msra.mxu0 %v145
    %174 = vmatprep.subr.bf16.mxu0 0
    %175 = vmatpush1.bf16.msra.mxu0 %v144
    %176 = vmatprep.subr.bf16.mxu0 0
    %177 = vmatpush2.bf16.msra.mxu0 0
    %178 = vmatprep.subr.bf16.mxu0 0
    %179 = vmatpush2.bf16.msra.mxu0 0
    %180 = vmatprep.subr.bf16.mxu0 0
    %181 = vmatpush2.bf16.msra.mxu0 0
    %182 = vmatprep.subr.bf16.mxu0 0
    %183 = vmatpush2.bf16.msra.mxu0 0
    %184 = vmatprep.subr.bf16.mxu0 0
    %185 = vmatpush2.bf16.msra.mxu0 0
    %186 = vmatprep.subr.bf16.mxu0 0
    %187 = vmatpush2.bf16.msra.mxu0 0
    %188 = vmatprep.subr.bf16.mxu0 0
    %189 = vmatpush2.bf16.msra.mxu0 0
    %190 = vmatprep.subr.bf16.mxu0 0
    %191 = vmatpush2.bf16.msra.mxu0 0
    %192 = vmatprep.mubr.bf16.mxu0 0
    %193 = vmatmul.mubr.bf16.gmra.mxu0 %v110
    %v194 = vpop.f32.mrf.mxu0
    %v195 = vadd.f32 0.0, %v194
    %v196 = vpop.f32.mrf.mxu0
    %v197 = vpop.f32.mrf.mxu0
    %v198 = vadd.f32 0.0, %v197
    %v199 = vpop.f32.mrf.mxu0
    %200 = vdwg.mxu0
    %v201 = vld [vmem:[%s2] sm:$0x1]
    %v202 = vld [vmem:[%s3] sm:$0x1]
    %203 = vadd.xlane.f32.xlu0 %v195
    %v204 = vpop.xlane.xlu0 %203
    %205 = vadd.xlane.f32.xlu0 %v198
    %v206 = vpop.xlane.xlu0 %205
    %v207 = vmul.f32 %v204, 0.03125
    %v208 = vmul.f32 %v206, 0.03125
    %v209 = vmul.f32 %v195, %v195
    %v210 = vmul.f32 %v198, %v198
    %211 = vadd.xlane.f32.xlu0 %v209
    %v212 = vpop.xlane.xlu0 %211
    %213 = vadd.xlane.f32.xlu0 %v210
    %v214 = vpop.xlane.xlu0 %213
    %v215 = vmul.f32 %v212, 0.03125
    %v216 = vmul.f32 %v214, 0.03125
    %v217 = vmul.f32 %v207, %v207
    %v218 = vmul.f32 %v208, %v208
    %v219 = vsub.f32 %v215, %v217
    %v220 = vsub.f32 %v216, %v218
    %v221 = vmax.f32 %v219, 0.0
    %v222 = vmax.f32 %v220, 0.0
    %v223 = vsub.f32 %v195, %v207
    %v224 = vsub.f32 %v198, %v208
    %v225 = vadd.f32 %v221, 1e-05
    %v226 = vadd.f32 %v222, 1e-05
    %v227 = vrsqrt.pop %v225
    %v228 = vrsqrt.pop %v226
    %v229 = vmul.f32 %v223, %v227
    %v230 = vmul.f32 %v224, %v228
    %v232 = vlaneseq
    %v233 = vshrl.u32 %v232, 7
    %v234 = vsub.s32 0, %v233
    %v235 = vrot.slane %v201, %v234
    %v237 = vmul.f32 %v229, %v235
    %v238 = vmul.f32 %v230, %v235
    %v240 = vlaneseq
    %v241 = vshrl.u32 %v240, 7
    %v242 = vsub.s32 0, %v241
    %v243 = vrot.slane %v202, %v242
    %v245 = vadd.f32 %v237, %v243
    %v246 = vadd.f32 %v238, %v243
    %v247 = vmax.f32 %v245, 0.0
    %v248 = vmax.f32 %v246, 0.0
    %v249 = vpack.c.bf16 %v248, %v247
    %v250 = vld [vmem:[#allocation6] sm:$0xf]
    %v251 = vld [vmem:[#allocation6 + $0x4] sm:$0xf]
    %v252 = vld [vmem:[#allocation6 + $0x8] sm:$0xf]
    %v253 = vld [vmem:[#allocation6 + $0xc] sm:$0xf]
    %v254 = vld [vmem:[#allocation6 + $0x10] sm:$0xf]
    %v255 = vld [vmem:[#allocation6 + $0x14] sm:$0xf]
    %v256 = vld [vmem:[#allocation6 + $0x18] sm:$0xf]
    %v257 = vld [vmem:[#allocation6 + $0x1c] sm:$0xf]
    %v258 = vld [vmem:[#allocation6 + $0x20] sm:$0xf]
    %v259 = vld [vmem:[#allocation6 + $0x24] sm:$0xf]
    %v260 = vld [vmem:[#allocation6 + $0x28] sm:$0xf]
    %v261 = vld [vmem:[#allocation6 + $0x2c] sm:$0xf]
    %v262 = vld [vmem:[#allocation6 + $0x30] sm:$0xf]
    %v263 = vld [vmem:[#allocation6 + $0x34] sm:$0xf]
    %v264 = vld [vmem:[#allocation6 + $0x38] sm:$0xf]
    %v265 = vld [vmem:[#allocation6 + $0x3c] sm:$0xf]
    %v282 = vunpack.c.l.b16 %v250
    %v283 = vunpack.c.l.b16 %v251
    %v284 = vunpack.c.l.b16 %v252
    %v285 = vunpack.c.l.b16 %v253
    %v286 = vunpack.c.l.b16 %v254
    %v287 = vunpack.c.l.b16 %v255
    %v288 = vunpack.c.l.b16 %v256
    %v289 = vunpack.c.l.b16 %v257
    %v290 = vunpack.c.l.b16 %v258
    %v291 = vunpack.c.l.b16 %v259
    %v292 = vunpack.c.l.b16 %v260
    %v293 = vunpack.c.l.b16 %v261
    %v294 = vunpack.c.l.b16 %v262
    %v295 = vunpack.c.l.b16 %v263
    %v296 = vunpack.c.l.b16 %v264
    %v297 = vunpack.c.l.b16 %v265
    %v298 = vpack.c.b16 %v283, %v282
    %v299 = vpack.c.b16 %v285, %v284
    %v300 = vpack.c.b16 %v287, %v286
    %v301 = vpack.c.b16 %v289, %v288
    %v302 = vpack.c.b16 %v291, %v290
    %v303 = vpack.c.b16 %v293, %v292
    %v304 = vpack.c.b16 %v295, %v294
    %v305 = vpack.c.b16 %v297, %v296
    %314 = vmatprep.subr.bf16.mxu0 0
    %315 = vmatpush1.bf16.msra.mxu0 %v305
    %316 = vmatprep.subr.bf16.mxu0 0
    %317 = vmatpush1.bf16.msra.mxu0 %v304
    %318 = vmatprep.subr.bf16.mxu0 0
    %319 = vmatpush1.bf16.msra.mxu0 %v303
    %320 = vmatprep.subr.bf16.mxu0 0
    %321 = vmatpush1.bf16.msra.mxu0 %v302
    %322 = vmatprep.subr.bf16.mxu0 0
    %323 = vmatpush1.bf16.msra.mxu0 %v301
    %324 = vmatprep.subr.bf16.mxu0 0
    %325 = vmatpush1.bf16.msra.mxu0 %v300
    %326 = vmatprep.subr.bf16.mxu0 0
    %327 = vmatpush1.bf16.msra.mxu0 %v299
    %328 = vmatprep.subr.bf16.mxu0 0
    %329 = vmatpush1.bf16.msra.mxu0 %v298
    %330 = vmatprep.subr.bf16.mxu0 0
    %331 = vmatpush2.bf16.msra.mxu0 0
    %332 = vmatprep.subr.bf16.mxu0 0
    %333 = vmatpush2.bf16.msra.mxu0 0
    %334 = vmatprep.subr.bf16.mxu0 0
    %335 = vmatpush2.bf16.msra.mxu0 0
    %336 = vmatprep.subr.bf16.mxu0 0
    %337 = vmatpush2.bf16.msra.mxu0 0
    %338 = vmatprep.subr.bf16.mxu0 0
    %339 = vmatpush2.bf16.msra.mxu0 0
    %340 = vmatprep.subr.bf16.mxu0 0
    %341 = vmatpush2.bf16.msra.mxu0 0
    %342 = vmatprep.subr.bf16.mxu0 0
    %343 = vmatpush2.bf16.msra.mxu0 0
    %344 = vmatprep.subr.bf16.mxu0 0
    %345 = vmatpush2.bf16.msra.mxu0 0
    %346 = vmatprep.mubr.bf16.mxu0 0
    %347 = vmatmul.mubr.bf16.gmra.mxu0 %v249
    %v348 = vpop.f32.mrf.mxu0
    %v349 = vadd.f32 0.0, %v348
    %v350 = vpop.f32.mrf.mxu0
    %v351 = vpop.f32.mrf.mxu0
    %v352 = vadd.f32 0.0, %v351
    %v353 = vpop.f32.mrf.mxu0
    %354 = vdwg.mxu0
    %v355 = vld [vmem:[%s5] sm:$0x1]
    %v356 = vld [vmem:[%s6] sm:$0x1]
    %357 = vadd.xlane.f32.xlu0 %v349
    %v358 = vpop.xlane.xlu0 %357
    %359 = vadd.xlane.f32.xlu0 %v352
    %v360 = vpop.xlane.xlu0 %359
    %v361 = vmul.f32 %v358, 0.03125
    %v362 = vmul.f32 %v360, 0.03125
    %v363 = vmul.f32 %v349, %v349
    %v364 = vmul.f32 %v352, %v352
    %365 = vadd.xlane.f32.xlu0 %v363
    %v366 = vpop.xlane.xlu0 %365
    %367 = vadd.xlane.f32.xlu0 %v364
    %v368 = vpop.xlane.xlu0 %367
    %v369 = vmul.f32 %v366, 0.03125
    %v370 = vmul.f32 %v368, 0.03125
    %v371 = vmul.f32 %v361, %v361
    %v372 = vmul.f32 %v362, %v362
    %v373 = vsub.f32 %v369, %v371
    %v374 = vsub.f32 %v370, %v372
    %v375 = vmax.f32 %v373, 0.0
    %v376 = vmax.f32 %v374, 0.0
    %v377 = vsub.f32 %v349, %v361
    %v378 = vsub.f32 %v352, %v362
    %v379 = vadd.f32 %v375, 1e-05
    %v380 = vadd.f32 %v376, 1e-05
    %v381 = vrsqrt.pop %v379
    %v382 = vrsqrt.pop %v380
    %v383 = vmul.f32 %v377, %v381
    %v384 = vmul.f32 %v378, %v382
    %v386 = vlaneseq
    %v387 = vshrl.u32 %v386, 7
    %v388 = vsub.s32 0, %v387
    %v389 = vrot.slane %v355, %v388
    %v391 = vmul.f32 %v383, %v389
    %v392 = vmul.f32 %v384, %v389
    %v394 = vlaneseq
    %v395 = vshrl.u32 %v394, 7
    %v396 = vsub.s32 0, %v395
    %v397 = vrot.slane %v356, %v396
    %v399 = vadd.f32 %v391, %v397
    %v400 = vadd.f32 %v392, %v397
    %v401 = vmax.f32 %v399, 0.0
    %v402 = vmax.f32 %v400, 0.0
    %v403 = vpack.c.bf16 %v402, %v401
    %v404 = vld [vmem:[#allocation7] sm:$0xf]
    %v405 = vld [vmem:[#allocation7 + $0x4] sm:$0xf]
    %v406 = vld [vmem:[#allocation7 + $0x8] sm:$0xf]
    %v407 = vld [vmem:[#allocation7 + $0xc] sm:$0xf]
    %v408 = vld [vmem:[#allocation7 + $0x10] sm:$0xf]
    %v409 = vld [vmem:[#allocation7 + $0x14] sm:$0xf]
    %v410 = vld [vmem:[#allocation7 + $0x18] sm:$0xf]
    %v411 = vld [vmem:[#allocation7 + $0x1c] sm:$0xf]
    %v412 = vld [vmem:[#allocation7 + $0x20] sm:$0xf]
    %v413 = vld [vmem:[#allocation7 + $0x24] sm:$0xf]
    %v414 = vld [vmem:[#allocation7 + $0x28] sm:$0xf]
    %v415 = vld [vmem:[#allocation7 + $0x2c] sm:$0xf]
    %v416 = vld [vmem:[#allocation7 + $0x30] sm:$0xf]
    %v417 = vld [vmem:[#allocation7 + $0x34] sm:$0xf]
    %v418 = vld [vmem:[#allocation7 + $0x38] sm:$0xf]
    %v419 = vld [vmem:[#allocation7 + $0x3c] sm:$0xf]
    %v420 = vld [vmem:[%s8] sm:$0x1]
    %v422 = vlaneseq
    %v423 = vshrl.u32 %v422, 7
    %v424 = vsub.s32 0, %v423
    %v425 = vrot.slane %v420, %v424
    %v443 = vunpack.c.l.b16 %v404
    %v444 = vunpack.c.l.b16 %v405
    %v445 = vunpack.c.l.b16 %v406
    %v446 = vunpack.c.l.b16 %v407
    %v447 = vunpack.c.l.b16 %v408
    %v448 = vunpack.c.l.b16 %v409
    %v449 = vunpack.c.l.b16 %v410
    %v450 = vunpack.c.l.b16 %v411
    %v451 = vunpack.c.l.b16 %v412
    %v452 = vunpack.c.l.b16 %v413
    %v453 = vunpack.c.l.b16 %v414
    %v454 = vunpack.c.l.b16 %v415
    %v455 = vunpack.c.l.b16 %v416
    %v456 = vunpack.c.l.b16 %v417
    %v457 = vunpack.c.l.b16 %v418
    %v458 = vunpack.c.l.b16 %v419
    %v459 = vpack.c.b16 %v444, %v443
    %v460 = vpack.c.b16 %v446, %v445
    %v461 = vpack.c.b16 %v448, %v447
    %v462 = vpack.c.b16 %v450, %v449
    %v463 = vpack.c.b16 %v452, %v451
    %v464 = vpack.c.b16 %v454, %v453
    %v465 = vpack.c.b16 %v456, %v455
    %v466 = vpack.c.b16 %v458, %v457
    %475 = vmatprep.subr.bf16.mxu0 0
    %476 = vmatpush1.bf16.msra.mxu0 %v466
    %477 = vmatprep.subr.bf16.mxu0 0
    %478 = vmatpush1.bf16.msra.mxu0 %v465
    %479 = vmatprep.subr.bf16.mxu0 0
    %480 = vmatpush1.bf16.msra.mxu0 %v464
    %481 = vmatprep.subr.bf16.mxu0 0
    %482 = vmatpush1.bf16.msra.mxu0 %v463
    %483 = vmatprep.subr.bf16.mxu0 0
    %484 = vmatpush1.bf16.msra.mxu0 %v462
    %485 = vmatprep.subr.bf16.mxu0 0
    %486 = vmatpush1.bf16.msra.mxu0 %v461
    %487 = vmatprep.subr.bf16.mxu0 0
    %488 = vmatpush1.bf16.msra.mxu0 %v460
    %489 = vmatprep.subr.bf16.mxu0 0
    %490 = vmatpush1.bf16.msra.mxu0 %v459
    %491 = vmatprep.subr.bf16.mxu0 0
    %492 = vmatpush2.bf16.msra.mxu0 0
    %493 = vmatprep.subr.bf16.mxu0 0
    %494 = vmatpush2.bf16.msra.mxu0 0
    %495 = vmatprep.subr.bf16.mxu0 0
    %496 = vmatpush2.bf16.msra.mxu0 0
    %497 = vmatprep.subr.bf16.mxu0 0
    %498 = vmatpush2.bf16.msra.mxu0 0
    %499 = vmatprep.subr.bf16.mxu0 0
    %500 = vmatpush2.bf16.msra.mxu0 0
    %501 = vmatprep.subr.bf16.mxu0 0
    %502 = vmatpush2.bf16.msra.mxu0 0
    %503 = vmatprep.subr.bf16.mxu0 0
    %504 = vmatpush2.bf16.msra.mxu0 0
    %505 = vmatprep.subr.bf16.mxu0 0
    %506 = vmatpush2.bf16.msra.mxu0 0
    %507 = vmatprep.mubr.bf16.mxu0 0
    %508 = vmatmul.mubr.bf16.gmra.mxu0 %v403
    %v509 = vpop.f32.mrf.mxu0
    %v510 = vadd.f32 %v425, %v509
    %v511 = vpop.f32.mrf.mxu0
    %v512 = vpop.f32.mrf.mxu0
    %v513 = vadd.f32 %v425, %v512
    %v514 = vpop.f32.mrf.mxu0
    %515 = vdwg.mxu0
    %vm516 = vcmask 31744
    %517 = vst.msk [vmem:[%s9] sm:$0xff] %vm516, %v510
    %518 = vst.msk [vmem:[%s9 + $0x8] sm:$0xff] %vm516, %v513
    // Predicated region
    $region54: #{tpu_custom_call.1} parent=1 // pred_check
      _
    $region55: #{tpu_custom_call.1} parent=1 // pred_check_branch
      %520 = sbr.rel (0) target = $region57
    $region56: #{tpu_custom_call.1} parent=1 // pred_region
      _
    $region57: #{tpu_custom_call.1} parent=1 // pred_fallthru
      _
    // Predicated region
    $region58: #{tpu_custom_call.1} parent=1 // pred_check
      _
    $region59: #{tpu_custom_call.1} parent=1 // pred_check_branch
      %522 = sbr.rel (0) target = $region61
    $region60: #{tpu_custom_call.1} parent=1 // pred_region
      _
    $region61: #{tpu_custom_call.1} parent=1 // pred_fallthru
      _
    %523 = vsyncpa [#allocation3], 1
    %524 = vsyncpa [#allocation5], 1
    %525 = vsyncpa [#allocation8], 1

</llo_original>
